<compile_context>
chip_gen: v5e
topology: v5e:2x2
jax: 0.10.0
libtpu: 0.0.40
codegen_flags: <defaults>
</compile_context>

<pallas_src>
import functools

import numpy as np
import jax
import jax.numpy as jnp
from jax.experimental import pallas as pl
from jax.experimental.pallas import tpu as pltpu


# ---------------------------------------------------------------------------
# Parameter construction (mirrors the torch __init__)
# ---------------------------------------------------------------------------
def _build_c0_c1(num_bits_per_symbol: int):
    num_points = 2 ** num_bits_per_symbol
    a = np.zeros([num_points, num_bits_per_symbol], dtype=np.int32)
    for i in range(num_points):
        a[i, :] = np.array(list(np.binary_repr(i, num_bits_per_symbol)),
                           dtype=np.int32)
    half = num_points // 2
    c0 = np.zeros([half, num_bits_per_symbol], dtype=np.int32)
    c1 = np.zeros([half, num_bits_per_symbol], dtype=np.int32)
    for i in range(num_bits_per_symbol):
        c0[:, i] = np.where(a[:, i] == 0)[0]
        c1[:, i] = np.where(a[:, i] == 1)[0]
    return c0, c1


def _round_up(x: int, m: int) -> int:
    return (x + m - 1) // m * m


def _choose_tile(batch: int, max_batch_tile: int):
    """Lane-aligned batch tile + padded batch size.  Ensures TB % 128 == 0 and
    >= 2 grid steps when the batch allows it (so v7x's two TCs both get work)."""
    cap = max(128, (int(max_batch_tile) // 128) * 128)
    b128 = _round_up(batch, 128)
    n_tiles = max(1, -(-b128 // cap))          # ceil div
    if n_tiles == 1 and b128 >= 256:
        n_tiles = 2
    tb = _round_up(-(-b128 // n_tiles), 128)
    b_pad = n_tiles * tb
    return tb, b_pad


# ---------------------------------------------------------------------------
# Wrapper-side bitmask packing (fused with the input transpose by XLA)
# ---------------------------------------------------------------------------
def _pack_masks(path_inds, num_points):
    """path_inds [B, K, S] int32 -> mask [B, K, n_words] uint32 with bit
    (p - 32*w) of word w set iff any stream of the path uses point p."""
    n_words = (num_points + 31) // 32
    p = path_inds.astype(jnp.uint32)
    words = []
    for w in range(n_words):
        lo = jnp.uint32(32 * w)
        hi = jnp.uint32(32 * (w + 1))
        in_word = jnp.logical_and(p >= lo, p < hi)
        bit = (p - lo) & jnp.uint32(31)
        val = jnp.where(in_word, jnp.uint32(1) << bit, jnp.uint32(0))   # [B,K,S]
        mw = val[..., 0]
        for s in range(1, val.shape[-1]):
            mw = mw | val[..., s]
        words.append(mw)                                                # [B,K]
    mask = jnp.stack(words, axis=-1)                                    # [B,K,W]
    return mask, n_words


# ---------------------------------------------------------------------------
# Kernel
# ---------------------------------------------------------------------------
def _list2llr_kernel(dists_ref, mask_ref, out_ref, *,
                     num_paths, n_words, num_points, num_bits,
                     scale, llr_clip_val):
    # dists_ref: [K, TB]            f32
    # mask_ref : [K*n_words, TB]    u32
    # out_ref  : [nb*half, TB]      f32   row = bit*half + j  (bit-major)
    K = num_paths
    P = num_points
    nb = num_bits
    half = P // 2
    TB = dists_ref.shape[1]
    inf = jnp.float32(jnp.inf)

    d = dists_ref[...]                               # [K, TB]
    if scale != 1.0:
        d = d * jnp.float32(scale)                   # 8 rows, cheap; min commutes
    masks = mask_ref[...]                            # [K*n_words, TB] uint32

    # m[p, b] = min over paths k of d[k, b] restricted to paths whose bitmask
    # contains constellation point p (else +inf).  Pure VPU select/min; the
    # +inf sentinel is kept so empty sets give +-clip / NaN exactly like torch.
    word_mins = []
    for w in range(n_words):
        pw = min(32, P - 32 * w)
        bitpos = jax.lax.broadcasted_iota(jnp.uint32, (pw, TB), 0)
        pbit = jnp.uint32(1) << bitpos               # row p holds (1 << p)
        mw = jnp.full((pw, TB), inf, dtype=jnp.float32)
        for k in range(K):
            mrow = masks[k * n_words + w:k * n_words + w + 1, :]     # [1, TB]
            member = (mrow & pbit) != 0                              # [pw, TB]
            mw = jnp.minimum(mw, jnp.where(member, d[k:k + 1, :], inf))
        word_mins.append(mw)
    m = word_mins[0] if n_words == 1 else jnp.concatenate(word_mins, axis=0)

    # Per-bit LLRs from static slices:  c1[j,i] = c0[j,i] + 2**(nb-1-i), and the
    # bit-i==0 points form contiguous blocks of length off = 2**(nb-1-i).
    # out row (i*half + a*off + b) = m[2a*off + b] - m[2a*off + off + b].
    for i in range(nb):
        off = 1 << (nb - 1 - i)
        for a in range(1 << i):
            p0 = 2 * a * off
            llr = m[p0:p0 + off, :] - m[p0 + off:p0 + 2 * off, :]
            out_ref[pl.ds(i * half + a * off, off), :] = jnp.clip(
                llr, -llr_clip_val, llr_clip_val)


# ---------------------------------------------------------------------------
# Public wrapper
# ---------------------------------------------------------------------------
def list2llr_simple(inputs, num_bits_per_symbol, llr_clip_val=20.0,
                    max_batch_tile=512):
    """JAX/Pallas equivalent of List2LLRSimple.forward(inputs)."""
    y, _r, dists, path_inds, _path_syms = inputs

    dists = dists.astype(jnp.float32)
    path_inds = path_inds.astype(jnp.int32)

    # Intended semantics of `torch.is_floating_point(inputs[0])`: halve the
    # distances for the real-valued channel representation.
    scale = 0.5 if jnp.issubdtype(y.dtype, jnp.floating) else 1.0

    nb = int(num_bits_per_symbol)
    P = 2 ** nb
    half = P // 2
    B, K = dists.shape

    TB, B_pad = _choose_tile(B, max_batch_tile)
    assert TB % 128 == 0 and B_pad % TB == 0, (TB, B_pad)

    # Pack per-path constellation bitmasks and move batch to the lane axis.
    mask, n_words = _pack_masks(path_inds, P)              # [B, K, W] uint32
    mask_t = jnp.transpose(mask, (1, 2, 0)).reshape(K * n_words, B)
    dists_t = jnp.transpose(dists, (1, 0))                 # [K, B]
    if B_pad != B:
        pad = B_pad - B
        dists_t = jnp.pad(dists_t, ((0, 0), (0, pad)))
        mask_t = jnp.pad(mask_t, ((0, 0), (0, pad)))       # mask=0 -> m=inf -> NaN rows, sliced off

    kernel = functools.partial(
        _list2llr_kernel,
        num_paths=K, n_words=n_words, num_points=P, num_bits=nb,
        scale=float(scale), llr_clip_val=float(llr_clip_val))

    out_t = pl.pallas_call(
        kernel,
        out_shape=jax.ShapeDtypeStruct((nb * half, B_pad), jnp.float32),
        grid_spec=pltpu.PrefetchScalarGridSpec(
            num_scalar_prefetch=0,
            grid=(B_pad // TB,),
            in_specs=[
                pl.BlockSpec((K, TB), lambda b: (0, b)),              # dists_t
                pl.BlockSpec((K * n_words, TB), lambda b: (0, b)),    # mask_t
            ],
            out_specs=pl.BlockSpec((nb * half, TB), lambda b: (0, b)),
        ),
        compiler_params=pltpu.CompilerParams(
            dimension_semantics=("parallel",)),
    )(dists_t, mask_t)

    # [nb*half, B_pad] bit-major rows -> [B, half, nb]
    llr = jnp.transpose(out_t.reshape(nb, half, B_pad), (2, 1, 0))[:B]
    return llr


# ---------------------------------------------------------------------------
# Pure-jnp reference mirroring the torch forward literally
# ---------------------------------------------------------------------------
def _reference(inputs, num_bits_per_symbol, llr_clip_val=20.0):
    y, _r, dists, path_inds, _path_syms = inputs
    dists = dists.astype(jnp.float32)
    if jnp.issubdtype(y.dtype, jnp.floating):
        dists = dists / 2.0
    c0_np, c1_np = _build_c0_c1(num_bits_per_symbol)
    c0 = jnp.asarray(c0_np, jnp.int32)
    c1 = jnp.asarray(c1_np, jnp.int32)
    p = path_inds[:, :, :, None, None]                # [B,K,S,1,1]
    b0 = jnp.any(p == c0[None, None, None], axis=-3)  # [B,K,half,Nb]
    b1 = jnp.any(p == c1[None, None, None], axis=-3)
    dd = dists[:, :, None, None]
    l0 = jnp.min(jnp.where(b0, dd, jnp.inf), axis=1)
    l1 = jnp.min(jnp.where(b1, dd, jnp.inf), axis=1)
    return jnp.clip(l0 - l1, -llr_clip_val, llr_clip_val)


if __name__ == "__main__":
    key = jax.random.PRNGKey(0)
    k1, k2, k3, k4, k5 = jax.random.split(key, 5)

    B = 2                 # batch
    S = 4                 # num_streams
    K = 8                 # num_paths (K-best list size)
    num_bits = 4          # 16-QAM
    num_points = 2 ** num_bits

    # Case 1: real-valued channel representation (float y) => dists halved.
    y = jax.random.normal(k1, (B, 2 * S), dtype=jnp.float32)
    r = jnp.triu(jax.random.normal(k2, (B, S, S), dtype=jnp.float32))
    dists = jax.random.uniform(k3, (B, K), dtype=jnp.float32) * 10.0
    path_inds = jax.random.randint(k4, (B, K, S), 0, num_points, dtype=jnp.int32)
    path_syms = jax.random.normal(k5, (B, K, S), dtype=jnp.float32)

    inputs = (y, r, dists, path_inds, path_syms)
    llr = jax.block_until_ready(list2llr_simple(inputs, num_bits, llr_clip_val=20.0))
    ref = _reference(inputs, num_bits, llr_clip_val=20.0)
    assert llr.shape == (B, num_points // 2, num_bits), llr.shape
    assert bool(jnp.allclose(llr, ref, atol=1e-6, equal_nan=True)), (
        "Pallas result does not match reference (float y)")

    # Case 2: complex channel representation (complex y) => dists NOT halved.
    y_c = (y[:, :S] + 1j * y[:, S:]).astype(jnp.complex64)
    inputs_c = (y_c, r.astype(jnp.complex64), dists, path_inds,
                path_syms.astype(jnp.complex64))
    llr_c = jax.block_until_ready(list2llr_simple(inputs_c, num_bits,
                                                  llr_clip_val=20.0))
    ref_c = _reference(inputs_c, num_bits, llr_clip_val=20.0)
    assert bool(jnp.allclose(llr_c, ref_c, atol=1e-6, equal_nan=True)), (
        "Pallas result does not match reference (complex y)")

    print("KERNEL_OK")
</pallas_src>

<mosaic_0001>
module attributes {stable_mosaic.version = 11 : i64} {
  func.func @_list2llr_kernel(%arg0: i32, %arg1: memref<8x128xf32, #tpu.memory_space<vmem>>, %arg2: memref<8x128xi32, #tpu.memory_space<vmem>>, %arg3: memref<32x128xf32, #tpu.memory_space<vmem>>) attributes {dimension_semantics = [#tpu.dimension_semantics<parallel>], iteration_bounds = array<i64: 1>, scalar_prefetch = 0 : i64, scratch_operands = 0 : i64, tpu.core_type = #tpu.core_type<tc>, window_params = [{transform_indices = @transform_0, window_bounds = array<i64: 8, 128>}, {transform_indices = @transform_1, window_bounds = array<i64: 8, 128>}, {transform_indices = @transform_2, window_bounds = array<i64: 32, 128>}]} {
    %c0 = arith.constant 0 : index
    %c0_0 = arith.constant 0 : index
    %0 = vector.load %arg1[%c0, %c0_0] : memref<8x128xf32, #tpu.memory_space<vmem>>, vector<8x128xf32>
    %cst = arith.constant 5.000000e-01 : f32
    %1 = vector.broadcast %cst : f32 to vector<8x128xf32>
    %2 = arith.mulf %0, %1 : vector<8x128xf32>
    %c0_1 = arith.constant 0 : index
    %c0_2 = arith.constant 0 : index
    %3 = vector.load %arg2[%c0_1, %c0_2] : memref<8x128xi32, #tpu.memory_space<vmem>>, vector<8x128xi32>
    %4 = tpu.iota {dimensions = array<i32: 0>} : vector<16x128xi32>
    %c1_i32 = arith.constant 1 : i32
    %5 = vector.broadcast %c1_i32 : i32 to vector<16x128xi32>
    %6 = arith.shli %5, %4 : vector<16x128xi32>
    %cst_3 = arith.constant 0x7F800000 : f32
    %7 = vector.broadcast %cst_3 : f32 to vector<16x128xf32>
    %8 = vector.extract_strided_slice %3 {offsets = [0, 0], sizes = [1, 128], strides = [1, 1]} : vector<8x128xi32> to vector<1x128xi32>
    %9 = vector.broadcast %8 : vector<1x128xi32> to vector<16x128xi32>
    %10 = arith.andi %9, %6 : vector<16x128xi32>
    %c0_i32 = arith.constant 0 : i32
    %11 = vector.broadcast %c0_i32 : i32 to vector<16x128xi32>
    %12 = arith.cmpi ne, %10, %11 : vector<16x128xi32>
    %13 = vector.extract_strided_slice %2 {offsets = [0, 0], sizes = [1, 128], strides = [1, 1]} : vector<8x128xf32> to vector<1x128xf32>
    %cst_4 = arith.constant 0x7F800000 : f32
    %14 = vector.shape_cast %13 : vector<1x128xf32> to vector<1x128xf32>
    %15 = vector.broadcast %14 : vector<1x128xf32> to vector<16x128xf32>
    %16 = vector.broadcast %cst_4 : f32 to vector<16x128xf32>
    %17 = arith.select %12, %15, %16 : vector<16x128xi1>, vector<16x128xf32>
    %18 = arith.minimumf %7, %17 : vector<16x128xf32>
    %19 = vector.extract_strided_slice %3 {offsets = [1, 0], sizes = [1, 128], strides = [1, 1]} : vector<8x128xi32> to vector<1x128xi32>
    %20 = vector.broadcast %19 : vector<1x128xi32> to vector<16x128xi32>
    %21 = arith.andi %20, %6 : vector<16x128xi32>
    %c0_i32_5 = arith.constant 0 : i32
    %22 = vector.broadcast %c0_i32_5 : i32 to vector<16x128xi32>
    %23 = arith.cmpi ne, %21, %22 : vector<16x128xi32>
    %24 = vector.extract_strided_slice %2 {offsets = [1, 0], sizes = [1, 128], strides = [1, 1]} : vector<8x128xf32> to vector<1x128xf32>
    %cst_6 = arith.constant 0x7F800000 : f32
    %25 = vector.shape_cast %24 : vector<1x128xf32> to vector<1x128xf32>
    %26 = vector.broadcast %25 : vector<1x128xf32> to vector<16x128xf32>
    %27 = vector.broadcast %cst_6 : f32 to vector<16x128xf32>
    %28 = arith.select %23, %26, %27 : vector<16x128xi1>, vector<16x128xf32>
    %29 = arith.minimumf %18, %28 : vector<16x128xf32>
    %30 = vector.extract_strided_slice %3 {offsets = [2, 0], sizes = [1, 128], strides = [1, 1]} : vector<8x128xi32> to vector<1x128xi32>
    %31 = vector.broadcast %30 : vector<1x128xi32> to vector<16x128xi32>
    %32 = arith.andi %31, %6 : vector<16x128xi32>
    %c0_i32_7 = arith.constant 0 : i32
    %33 = vector.broadcast %c0_i32_7 : i32 to vector<16x128xi32>
    %34 = arith.cmpi ne, %32, %33 : vector<16x128xi32>
    %35 = vector.extract_strided_slice %2 {offsets = [2, 0], sizes = [1, 128], strides = [1, 1]} : vector<8x128xf32> to vector<1x128xf32>
    %cst_8 = arith.constant 0x7F800000 : f32
    %36 = vector.shape_cast %35 : vector<1x128xf32> to vector<1x128xf32>
    %37 = vector.broadcast %36 : vector<1x128xf32> to vector<16x128xf32>
    %38 = vector.broadcast %cst_8 : f32 to vector<16x128xf32>
    %39 = arith.select %34, %37, %38 : vector<16x128xi1>, vector<16x128xf32>
    %40 = arith.minimumf %29, %39 : vector<16x128xf32>
    %41 = vector.extract_strided_slice %3 {offsets = [3, 0], sizes = [1, 128], strides = [1, 1]} : vector<8x128xi32> to vector<1x128xi32>
    %42 = vector.broadcast %41 : vector<1x128xi32> to vector<16x128xi32>
    %43 = arith.andi %42, %6 : vector<16x128xi32>
    %c0_i32_9 = arith.constant 0 : i32
    %44 = vector.broadcast %c0_i32_9 : i32 to vector<16x128xi32>
    %45 = arith.cmpi ne, %43, %44 : vector<16x128xi32>
    %46 = vector.extract_strided_slice %2 {offsets = [3, 0], sizes = [1, 128], strides = [1, 1]} : vector<8x128xf32> to vector<1x128xf32>
    %cst_10 = arith.constant 0x7F800000 : f32
    %47 = vector.shape_cast %46 : vector<1x128xf32> to vector<1x128xf32>
    %48 = vector.broadcast %47 : vector<1x128xf32> to vector<16x128xf32>
    %49 = vector.broadcast %cst_10 : f32 to vector<16x128xf32>
    %50 = arith.select %45, %48, %49 : vector<16x128xi1>, vector<16x128xf32>
    %51 = arith.minimumf %40, %50 : vector<16x128xf32>
    %52 = vector.extract_strided_slice %3 {offsets = [4, 0], sizes = [1, 128], strides = [1, 1]} : vector<8x128xi32> to vector<1x128xi32>
    %53 = vector.broadcast %52 : vector<1x128xi32> to vector<16x128xi32>
    %54 = arith.andi %53, %6 : vector<16x128xi32>
    %c0_i32_11 = arith.constant 0 : i32
    %55 = vector.broadcast %c0_i32_11 : i32 to vector<16x128xi32>
    %56 = arith.cmpi ne, %54, %55 : vector<16x128xi32>
    %57 = vector.extract_strided_slice %2 {offsets = [4, 0], sizes = [1, 128], strides = [1, 1]} : vector<8x128xf32> to vector<1x128xf32>
    %cst_12 = arith.constant 0x7F800000 : f32
    %58 = vector.shape_cast %57 : vector<1x128xf32> to vector<1x128xf32>
    %59 = vector.broadcast %58 : vector<1x128xf32> to vector<16x128xf32>
    %60 = vector.broadcast %cst_12 : f32 to vector<16x128xf32>
    %61 = arith.select %56, %59, %60 : vector<16x128xi1>, vector<16x128xf32>
    %62 = arith.minimumf %51, %61 : vector<16x128xf32>
    %63 = vector.extract_strided_slice %3 {offsets = [5, 0], sizes = [1, 128], strides = [1, 1]} : vector<8x128xi32> to vector<1x128xi32>
    %64 = vector.broadcast %63 : vector<1x128xi32> to vector<16x128xi32>
    %65 = arith.andi %64, %6 : vector<16x128xi32>
    %c0_i32_13 = arith.constant 0 : i32
    %66 = vector.broadcast %c0_i32_13 : i32 to vector<16x128xi32>
    %67 = arith.cmpi ne, %65, %66 : vector<16x128xi32>
    %68 = vector.extract_strided_slice %2 {offsets = [5, 0], sizes = [1, 128], strides = [1, 1]} : vector<8x128xf32> to vector<1x128xf32>
    %cst_14 = arith.constant 0x7F800000 : f32
    %69 = vector.shape_cast %68 : vector<1x128xf32> to vector<1x128xf32>
    %70 = vector.broadcast %69 : vector<1x128xf32> to vector<16x128xf32>
    %71 = vector.broadcast %cst_14 : f32 to vector<16x128xf32>
    %72 = arith.select %67, %70, %71 : vector<16x128xi1>, vector<16x128xf32>
    %73 = arith.minimumf %62, %72 : vector<16x128xf32>
    %74 = vector.extract_strided_slice %3 {offsets = [6, 0], sizes = [1, 128], strides = [1, 1]} : vector<8x128xi32> to vector<1x128xi32>
    %75 = vector.broadcast %74 : vector<1x128xi32> to vector<16x128xi32>
    %76 = arith.andi %75, %6 : vector<16x128xi32>
    %c0_i32_15 = arith.constant 0 : i32
    %77 = vector.broadcast %c0_i32_15 : i32 to vector<16x128xi32>
    %78 = arith.cmpi ne, %76, %77 : vector<16x128xi32>
    %79 = vector.extract_strided_slice %2 {offsets = [6, 0], sizes = [1, 128], strides = [1, 1]} : vector<8x128xf32> to vector<1x128xf32>
    %cst_16 = arith.constant 0x7F800000 : f32
    %80 = vector.shape_cast %79 : vector<1x128xf32> to vector<1x128xf32>
    %81 = vector.broadcast %80 : vector<1x128xf32> to vector<16x128xf32>
    %82 = vector.broadcast %cst_16 : f32 to vector<16x128xf32>
    %83 = arith.select %78, %81, %82 : vector<16x128xi1>, vector<16x128xf32>
    %84 = arith.minimumf %73, %83 : vector<16x128xf32>
    %85 = vector.extract_strided_slice %3 {offsets = [7, 0], sizes = [1, 128], strides = [1, 1]} : vector<8x128xi32> to vector<1x128xi32>
    %86 = vector.broadcast %85 : vector<1x128xi32> to vector<16x128xi32>
    %87 = arith.andi %86, %6 : vector<16x128xi32>
    %c0_i32_17 = arith.constant 0 : i32
    %88 = vector.broadcast %c0_i32_17 : i32 to vector<16x128xi32>
    %89 = arith.cmpi ne, %87, %88 : vector<16x128xi32>
    %90 = vector.extract_strided_slice %2 {offsets = [7, 0], sizes = [1, 128], strides = [1, 1]} : vector<8x128xf32> to vector<1x128xf32>
    %cst_18 = arith.constant 0x7F800000 : f32
    %91 = vector.shape_cast %90 : vector<1x128xf32> to vector<1x128xf32>
    %92 = vector.broadcast %91 : vector<1x128xf32> to vector<16x128xf32>
    %93 = vector.broadcast %cst_18 : f32 to vector<16x128xf32>
    %94 = arith.select %89, %92, %93 : vector<16x128xi1>, vector<16x128xf32>
    %95 = arith.minimumf %84, %94 : vector<16x128xf32>
    %96 = vector.extract_strided_slice %95 {offsets = [0, 0], sizes = [8, 128], strides = [1, 1]} : vector<16x128xf32> to vector<8x128xf32>
    %97 = vector.extract_strided_slice %95 {offsets = [8, 0], sizes = [8, 128], strides = [1, 1]} : vector<16x128xf32> to vector<8x128xf32>
    %98 = arith.subf %96, %97 : vector<8x128xf32>
    %cst_19 = arith.constant -2.000000e+01 : f32
    %cst_20 = arith.constant 2.000000e+01 : f32
    %99 = vector.broadcast %cst_19 : f32 to vector<8x128xf32>
    %100 = arith.maximumf %99, %98 : vector<8x128xf32>
    %101 = vector.broadcast %cst_20 : f32 to vector<8x128xf32>
    %102 = arith.minimumf %101, %100 : vector<8x128xf32>
    %c0_21 = arith.constant 0 : index
    %c0_22 = arith.constant 0 : index
    %103 = vector.load %arg3[%c0_21, %c0_22] : memref<32x128xf32, #tpu.memory_space<vmem>>, vector<8x128xf32>
    tpu.vector_store %arg3[%c0_21, %c0_22], %102 {strides = array<i32>} : memref<32x128xf32, #tpu.memory_space<vmem>>, vector<8x128xf32>,
    %104 = vector.extract_strided_slice %95 {offsets = [0, 0], sizes = [4, 128], strides = [1, 1]} : vector<16x128xf32> to vector<4x128xf32>
    %105 = vector.extract_strided_slice %95 {offsets = [4, 0], sizes = [4, 128], strides = [1, 1]} : vector<16x128xf32> to vector<4x128xf32>
    %106 = arith.subf %104, %105 : vector<4x128xf32>
    %cst_23 = arith.constant -2.000000e+01 : f32
    %cst_24 = arith.constant 2.000000e+01 : f32
    %107 = vector.broadcast %cst_23 : f32 to vector<4x128xf32>
    %108 = arith.maximumf %107, %106 : vector<4x128xf32>
    %109 = vector.broadcast %cst_24 : f32 to vector<4x128xf32>
    %110 = arith.minimumf %109, %108 : vector<4x128xf32>
    %c8 = arith.constant 8 : index
    %c0_25 = arith.constant 0 : index
    %111 = vector.load %arg3[%c8, %c0_25] : memref<32x128xf32, #tpu.memory_space<vmem>>, vector<4x128xf32>
    tpu.vector_store %arg3[%c8, %c0_25], %110 {strides = array<i32>} : memref<32x128xf32, #tpu.memory_space<vmem>>, vector<4x128xf32>,
    %112 = vector.extract_strided_slice %95 {offsets = [8, 0], sizes = [4, 128], strides = [1, 1]} : vector<16x128xf32> to vector<4x128xf32>
    %113 = vector.extract_strided_slice %95 {offsets = [12, 0], sizes = [4, 128], strides = [1, 1]} : vector<16x128xf32> to vector<4x128xf32>
    %114 = arith.subf %112, %113 : vector<4x128xf32>
    %cst_26 = arith.constant -2.000000e+01 : f32
    %cst_27 = arith.constant 2.000000e+01 : f32
    %115 = vector.broadcast %cst_26 : f32 to vector<4x128xf32>
    %116 = arith.maximumf %115, %114 : vector<4x128xf32>
    %117 = vector.broadcast %cst_27 : f32 to vector<4x128xf32>
    %118 = arith.minimumf %117, %116 : vector<4x128xf32>
    %c12 = arith.constant 12 : index
    %c0_28 = arith.constant 0 : index
    %119 = vector.load %arg3[%c12, %c0_28] : memref<32x128xf32, #tpu.memory_space<vmem>>, vector<4x128xf32>
    tpu.vector_store %arg3[%c12, %c0_28], %118 {strides = array<i32>} : memref<32x128xf32, #tpu.memory_space<vmem>>, vector<4x128xf32>,
    %120 = vector.extract_strided_slice %95 {offsets = [0, 0], sizes = [2, 128], strides = [1, 1]} : vector<16x128xf32> to vector<2x128xf32>
    %121 = vector.extract_strided_slice %95 {offsets = [2, 0], sizes = [2, 128], strides = [1, 1]} : vector<16x128xf32> to vector<2x128xf32>
    %122 = arith.subf %120, %121 : vector<2x128xf32>
    %cst_29 = arith.constant -2.000000e+01 : f32
    %cst_30 = arith.constant 2.000000e+01 : f32
    %123 = vector.broadcast %cst_29 : f32 to vector<2x128xf32>
    %124 = arith.maximumf %123, %122 : vector<2x128xf32>
    %125 = vector.broadcast %cst_30 : f32 to vector<2x128xf32>
    %126 = arith.minimumf %125, %124 : vector<2x128xf32>
    %c16 = arith.constant 16 : index
    %c0_31 = arith.constant 0 : index
    %127 = vector.load %arg3[%c16, %c0_31] : memref<32x128xf32, #tpu.memory_space<vmem>>, vector<2x128xf32>
    tpu.vector_store %arg3[%c16, %c0_31], %126 {strides = array<i32>} : memref<32x128xf32, #tpu.memory_space<vmem>>, vector<2x128xf32>,
    %128 = vector.extract_strided_slice %95 {offsets = [4, 0], sizes = [2, 128], strides = [1, 1]} : vector<16x128xf32> to vector<2x128xf32>
    %129 = vector.extract_strided_slice %95 {offsets = [6, 0], sizes = [2, 128], strides = [1, 1]} : vector<16x128xf32> to vector<2x128xf32>
    %130 = arith.subf %128, %129 : vector<2x128xf32>
    %cst_32 = arith.constant -2.000000e+01 : f32
    %cst_33 = arith.constant 2.000000e+01 : f32
    %131 = vector.broadcast %cst_32 : f32 to vector<2x128xf32>
    %132 = arith.maximumf %131, %130 : vector<2x128xf32>
    %133 = vector.broadcast %cst_33 : f32 to vector<2x128xf32>
    %134 = arith.minimumf %133, %132 : vector<2x128xf32>
    %c18 = arith.constant 18 : index
    %c0_34 = arith.constant 0 : index
    %135 = vector.load %arg3[%c18, %c0_34] : memref<32x128xf32, #tpu.memory_space<vmem>>, vector<2x128xf32>
    tpu.vector_store %arg3[%c18, %c0_34], %134 {strides = array<i32>} : memref<32x128xf32, #tpu.memory_space<vmem>>, vector<2x128xf32>,
    %136 = vector.extract_strided_slice %95 {offsets = [8, 0], sizes = [2, 128], strides = [1, 1]} : vector<16x128xf32> to vector<2x128xf32>
    %137 = vector.extract_strided_slice %95 {offsets = [10, 0], sizes = [2, 128], strides = [1, 1]} : vector<16x128xf32> to vector<2x128xf32>
    %138 = arith.subf %136, %137 : vector<2x128xf32>
    %cst_35 = arith.constant -2.000000e+01 : f32
    %cst_36 = arith.constant 2.000000e+01 : f32
    %139 = vector.broadcast %cst_35 : f32 to vector<2x128xf32>
    %140 = arith.maximumf %139, %138 : vector<2x128xf32>
    %141 = vector.broadcast %cst_36 : f32 to vector<2x128xf32>
    %142 = arith.minimumf %141, %140 : vector<2x128xf32>
    %c20 = arith.constant 20 : index
    %c0_37 = arith.constant 0 : index
    %143 = vector.load %arg3[%c20, %c0_37] : memref<32x128xf32, #tpu.memory_space<vmem>>, vector<2x128xf32>
    tpu.vector_store %arg3[%c20, %c0_37], %142 {strides = array<i32>} : memref<32x128xf32, #tpu.memory_space<vmem>>, vector<2x128xf32>,
    %144 = vector.extract_strided_slice %95 {offsets = [12, 0], sizes = [2, 128], strides = [1, 1]} : vector<16x128xf32> to vector<2x128xf32>
    %145 = vector.extract_strided_slice %95 {offsets = [14, 0], sizes = [2, 128], strides = [1, 1]} : vector<16x128xf32> to vector<2x128xf32>
    %146 = arith.subf %144, %145 : vector<2x128xf32>
    %cst_38 = arith.constant -2.000000e+01 : f32
    %cst_39 = arith.constant 2.000000e+01 : f32
    %147 = vector.broadcast %cst_38 : f32 to vector<2x128xf32>
    %148 = arith.maximumf %147, %146 : vector<2x128xf32>
    %149 = vector.broadcast %cst_39 : f32 to vector<2x128xf32>
    %150 = arith.minimumf %149, %148 : vector<2x128xf32>
    %c22 = arith.constant 22 : index
    %c0_40 = arith.constant 0 : index
    %151 = vector.load %arg3[%c22, %c0_40] : memref<32x128xf32, #tpu.memory_space<vmem>>, vector<2x128xf32>
    tpu.vector_store %arg3[%c22, %c0_40], %150 {strides = array<i32>} : memref<32x128xf32, #tpu.memory_space<vmem>>, vector<2x128xf32>,
    %152 = vector.extract_strided_slice %95 {offsets = [0, 0], sizes = [1, 128], strides = [1, 1]} : vector<16x128xf32> to vector<1x128xf32>
    %153 = vector.extract_strided_slice %95 {offsets = [1, 0], sizes = [1, 128], strides = [1, 1]} : vector<16x128xf32> to vector<1x128xf32>
    %154 = arith.subf %152, %153 : vector<1x128xf32>
    %cst_41 = arith.constant -2.000000e+01 : f32
    %cst_42 = arith.constant 2.000000e+01 : f32
    %155 = vector.broadcast %cst_41 : f32 to vector<1x128xf32>
    %156 = arith.maximumf %155, %154 : vector<1x128xf32>
    %157 = vector.broadcast %cst_42 : f32 to vector<1x128xf32>
    %158 = arith.minimumf %157, %156 : vector<1x128xf32>
    %c24 = arith.constant 24 : index
    %c0_43 = arith.constant 0 : index
    %159 = vector.load %arg3[%c24, %c0_43] : memref<32x128xf32, #tpu.memory_space<vmem>>, vector<1x128xf32>
    tpu.vector_store %arg3[%c24, %c0_43], %158 {strides = array<i32>} : memref<32x128xf32, #tpu.memory_space<vmem>>, vector<1x128xf32>,
    %160 = vector.extract_strided_slice %95 {offsets = [2, 0], sizes = [1, 128], strides = [1, 1]} : vector<16x128xf32> to vector<1x128xf32>
    %161 = vector.extract_strided_slice %95 {offsets = [3, 0], sizes = [1, 128], strides = [1, 1]} : vector<16x128xf32> to vector<1x128xf32>
    %162 = arith.subf %160, %161 : vector<1x128xf32>
    %cst_44 = arith.constant -2.000000e+01 : f32
    %cst_45 = arith.constant 2.000000e+01 : f32
    %163 = vector.broadcast %cst_44 : f32 to vector<1x128xf32>
    %164 = arith.maximumf %163, %162 : vector<1x128xf32>
    %165 = vector.broadcast %cst_45 : f32 to vector<1x128xf32>
    %166 = arith.minimumf %165, %164 : vector<1x128xf32>
    %c25 = arith.constant 25 : index
    %c0_46 = arith.constant 0 : index
    %167 = vector.load %arg3[%c25, %c0_46] : memref<32x128xf32, #tpu.memory_space<vmem>>, vector<1x128xf32>
    tpu.vector_store %arg3[%c25, %c0_46], %166 {strides = array<i32>} : memref<32x128xf32, #tpu.memory_space<vmem>>, vector<1x128xf32>,
    %168 = vector.extract_strided_slice %95 {offsets = [4, 0], sizes = [1, 128], strides = [1, 1]} : vector<16x128xf32> to vector<1x128xf32>
    %169 = vector.extract_strided_slice %95 {offsets = [5, 0], sizes = [1, 128], strides = [1, 1]} : vector<16x128xf32> to vector<1x128xf32>
    %170 = arith.subf %168, %169 : vector<1x128xf32>
    %cst_47 = arith.constant -2.000000e+01 : f32
    %cst_48 = arith.constant 2.000000e+01 : f32
    %171 = vector.broadcast %cst_47 : f32 to vector<1x128xf32>
    %172 = arith.maximumf %171, %170 : vector<1x128xf32>
    %173 = vector.broadcast %cst_48 : f32 to vector<1x128xf32>
    %174 = arith.minimumf %173, %172 : vector<1x128xf32>
    %c26 = arith.constant 26 : index
    %c0_49 = arith.constant 0 : index
    %175 = vector.load %arg3[%c26, %c0_49] : memref<32x128xf32, #tpu.memory_space<vmem>>, vector<1x128xf32>
    tpu.vector_store %arg3[%c26, %c0_49], %174 {strides = array<i32>} : memref<32x128xf32, #tpu.memory_space<vmem>>, vector<1x128xf32>,
    %176 = vector.extract_strided_slice %95 {offsets = [6, 0], sizes = [1, 128], strides = [1, 1]} : vector<16x128xf32> to vector<1x128xf32>
    %177 = vector.extract_strided_slice %95 {offsets = [7, 0], sizes = [1, 128], strides = [1, 1]} : vector<16x128xf32> to vector<1x128xf32>
    %178 = arith.subf %176, %177 : vector<1x128xf32>
    %cst_50 = arith.constant -2.000000e+01 : f32
    %cst_51 = arith.constant 2.000000e+01 : f32
    %179 = vector.broadcast %cst_50 : f32 to vector<1x128xf32>
    %180 = arith.maximumf %179, %178 : vector<1x128xf32>
    %181 = vector.broadcast %cst_51 : f32 to vector<1x128xf32>
    %182 = arith.minimumf %181, %180 : vector<1x128xf32>
    %c27 = arith.constant 27 : index
    %c0_52 = arith.constant 0 : index
    %183 = vector.load %arg3[%c27, %c0_52] : memref<32x128xf32, #tpu.memory_space<vmem>>, vector<1x128xf32>
    tpu.vector_store %arg3[%c27, %c0_52], %182 {strides = array<i32>} : memref<32x128xf32, #tpu.memory_space<vmem>>, vector<1x128xf32>,
    %184 = vector.extract_strided_slice %95 {offsets = [8, 0], sizes = [1, 128], strides = [1, 1]} : vector<16x128xf32> to vector<1x128xf32>
    %185 = vector.extract_strided_slice %95 {offsets = [9, 0], sizes = [1, 128], strides = [1, 1]} : vector<16x128xf32> to vector<1x128xf32>
    %186 = arith.subf %184, %185 : vector<1x128xf32>
    %cst_53 = arith.constant -2.000000e+01 : f32
    %cst_54 = arith.constant 2.000000e+01 : f32
    %187 = vector.broadcast %cst_53 : f32 to vector<1x128xf32>
    %188 = arith.maximumf %187, %186 : vector<1x128xf32>
    %189 = vector.broadcast %cst_54 : f32 to vector<1x128xf32>
    %190 = arith.minimumf %189, %188 : vector<1x128xf32>
    %c28 = arith.constant 28 : index
    %c0_55 = arith.constant 0 : index
    %191 = vector.load %arg3[%c28, %c0_55] : memref<32x128xf32, #tpu.memory_space<vmem>>, vector<1x128xf32>
    tpu.vector_store %arg3[%c28, %c0_55], %190 {strides = array<i32>} : memref<32x128xf32, #tpu.memory_space<vmem>>, vector<1x128xf32>,
    %192 = vector.extract_strided_slice %95 {offsets = [10, 0], sizes = [1, 128], strides = [1, 1]} : vector<16x128xf32> to vector<1x128xf32>
    %193 = vector.extract_strided_slice %95 {offsets = [11, 0], sizes = [1, 128], strides = [1, 1]} : vector<16x128xf32> to vector<1x128xf32>
    %194 = arith.subf %192, %193 : vector<1x128xf32>
    %cst_56 = arith.constant -2.000000e+01 : f32
    %cst_57 = arith.constant 2.000000e+01 : f32
    %195 = vector.broadcast %cst_56 : f32 to vector<1x128xf32>
    %196 = arith.maximumf %195, %194 : vector<1x128xf32>
    %197 = vector.broadcast %cst_57 : f32 to vector<1x128xf32>
    %198 = arith.minimumf %197, %196 : vector<1x128xf32>
    %c29 = arith.constant 29 : index
    %c0_58 = arith.constant 0 : index
    %199 = vector.load %arg3[%c29, %c0_58] : memref<32x128xf32, #tpu.memory_space<vmem>>, vector<1x128xf32>
    tpu.vector_store %arg3[%c29, %c0_58], %198 {strides = array<i32>} : memref<32x128xf32, #tpu.memory_space<vmem>>, vector<1x128xf32>,
    %200 = vector.extract_strided_slice %95 {offsets = [12, 0], sizes = [1, 128], strides = [1, 1]} : vector<16x128xf32> to vector<1x128xf32>
    %201 = vector.extract_strided_slice %95 {offsets = [13, 0], sizes = [1, 128], strides = [1, 1]} : vector<16x128xf32> to vector<1x128xf32>
    %202 = arith.subf %200, %201 : vector<1x128xf32>
    %cst_59 = arith.constant -2.000000e+01 : f32
    %cst_60 = arith.constant 2.000000e+01 : f32
    %203 = vector.broadcast %cst_59 : f32 to vector<1x128xf32>
    %204 = arith.maximumf %203, %202 : vector<1x128xf32>
    %205 = vector.broadcast %cst_60 : f32 to vector<1x128xf32>
    %206 = arith.minimumf %205, %204 : vector<1x128xf32>
    %c30 = arith.constant 30 : index
    %c0_61 = arith.constant 0 : index
    %207 = vector.load %arg3[%c30, %c0_61] : memref<32x128xf32, #tpu.memory_space<vmem>>, vector<1x128xf32>
    tpu.vector_store %arg3[%c30, %c0_61], %206 {strides = array<i32>} : memref<32x128xf32, #tpu.memory_space<vmem>>, vector<1x128xf32>,
    %208 = vector.extract_strided_slice %95 {offsets = [14, 0], sizes = [1, 128], strides = [1, 1]} : vector<16x128xf32> to vector<1x128xf32>
    %209 = vector.extract_strided_slice %95 {offsets = [15, 0], sizes = [1, 128], strides = [1, 1]} : vector<16x128xf32> to vector<1x128xf32>
    %210 = arith.subf %208, %209 : vector<1x128xf32>
    %cst_62 = arith.constant -2.000000e+01 : f32
    %cst_63 = arith.constant 2.000000e+01 : f32
    %211 = vector.broadcast %cst_62 : f32 to vector<1x128xf32>
    %212 = arith.maximumf %211, %210 : vector<1x128xf32>
    %213 = vector.broadcast %cst_63 : f32 to vector<1x128xf32>
    %214 = arith.minimumf %213, %212 : vector<1x128xf32>
    %c31 = arith.constant 31 : index
    %c0_64 = arith.constant 0 : index
    %215 = vector.load %arg3[%c31, %c0_64] : memref<32x128xf32, #tpu.memory_space<vmem>>, vector<1x128xf32>
    tpu.vector_store %arg3[%c31, %c0_64], %214 {strides = array<i32>} : memref<32x128xf32, #tpu.memory_space<vmem>>, vector<1x128xf32>,
    return
  }
  func.func @transform_0(%arg0: i32) -> (i32, i32) {
    %c0_i32 = arith.constant 0 : i32
    %c0_i32_0 = arith.constant 0 : i32
    return %c0_i32, %arg0 : i32, i32
  }
  func.func @transform_1(%arg0: i32) -> (i32, i32) {
    %c0_i32 = arith.constant 0 : i32
    %c0_i32_0 = arith.constant 0 : i32
    return %c0_i32, %arg0 : i32, i32
  }
  func.func @transform_2(%arg0: i32) -> (i32, i32) {
    %c0_i32 = arith.constant 0 : i32
    %c0_i32_0 = arith.constant 0 : i32
    return %c0_i32, %arg0 : i32, i32
  }
}

</mosaic_0001>

<llo_original>
// kernel: tpu_custom_call.1
$region0: #{tpu_custom_call.1}
  #allocation0 [shape = 'u32[]', space=smem, size = 0x4, offset = 0x4, fixed_abs, tag = 'smem constant byte address 0x4 - core index']
  #allocation1 [shape = 'u32[72,128]{1,0:T(1,128)}', space=vmem, size = 0x9000, scoped, tag = 'internal scratch']
  %s0 = inlined_call_operand.hbm [shape: f32[8,128], index: 0, kind: input, shape index: {}]
  %s1 = inlined_call_operand.hbm [shape: u32[8,128], index: 1, kind: input, shape index: {}]
  %s2 = inlined_call_operand.hbm [shape: f32[32,128], index: 2, kind: output, shape index: {}]
  %s3 = sld [smem:[#allocation0]]
  $region26: #{tpu_custom_call.1} parent=0
    _
  %s5 = ssub.s32 1, %s3
  %s6 = scalar_select 0, %s5, %s3
  $region1: #{tpu_custom_call.1} parent=0
    #allocation2 [shape = 'u8[4096]{0}', space=vmem, size = 0x1000, scoped, tag = 'input window, operand 0, single buffered']
    #allocation3 [shape = 's32[1]{0}', space=sflag, size = 0x4, scoped, tag = 'scoped memory for tpu_custom_call.1']
    #allocation4 [shape = 's32[1]{0}', space=sflag, size = 0x4, scoped, tag = 'scoped memory for tpu_custom_call.1']
    #allocation5 [shape = 'u8[4096]{0}', space=vmem, size = 0x1000, scoped, tag = 'input window, operand 1, single buffered']
    #allocation6 [shape = 's32[1]{0}', space=sflag, size = 0x4, scoped, tag = 'scoped memory for tpu_custom_call.1']
    #allocation7 [shape = 'u8[16384]{0}', space=vmem, size = 0x4000, scoped, tag = 'output window, operand 0, single buffered']
    %7 = vsyncpa [#allocation3], 0
    %8 = vsyncpa [#allocation6], 0
    %9 = vsyncpa [#allocation4], 0
    // Predicated region
    $region2: #{tpu_custom_call.1} parent=1 // pred_check
      _
    $region3: #{tpu_custom_call.1} parent=1 // pred_check_branch
      %11 = sbr.rel (0) target = $region5
    $region4: #{tpu_custom_call.1} parent=1 // pred_region
      %13 = vsyncadd [#allocation3], 0
      %s15 = sshll.u32 %s0, 4
      %s16 = int_to_ptr.hbm [resolvable:$true] %s15
      %s17 = sshll.u32 [#allocation2], 4
      %s18 = int_to_ptr.vmem [resolvable:$true] %s17
      %20 = dma.hbm_to_vmem [thread:$0]  %s16, 128, %s18, [#allocation3]
    $region5: #{tpu_custom_call.1} parent=1 // pred_fallthru
      _
    // Predicated region
    $region6: #{tpu_custom_call.1} parent=1 // pred_check
      _
    $region7: #{tpu_custom_call.1} parent=1 // pred_check_branch
      %22 = sbr.rel (0) target = $region9
    $region8: #{tpu_custom_call.1} parent=1 // pred_region
      %24 = vsyncadd [#allocation6], 0
      %s26 = sshll.u32 %s1, 4
      %s27 = int_to_ptr.hbm [resolvable:$true] %s26
      %s28 = sshll.u32 [#allocation5], 4
      %s29 = int_to_ptr.vmem [resolvable:$true] %s28
      %31 = dma.hbm_to_vmem [thread:$0]  %s27, 128, %s29, [#allocation6]
    $region9: #{tpu_custom_call.1} parent=1 // pred_fallthru
      _
    // Predicated region
    $region10: #{tpu_custom_call.1} parent=1 // pred_check
      _
    $region11: #{tpu_custom_call.1} parent=1 // pred_check_branch
      %33 = sbr.rel (0) target = $region13
    $region12: #{tpu_custom_call.1} parent=1 // pred_region
      %35 = dma.done [#allocation3], 128
    $region13: #{tpu_custom_call.1} parent=1 // pred_fallthru
      _
    // Predicated region
    $region14: #{tpu_custom_call.1} parent=1 // pred_check
      _
    $region15: #{tpu_custom_call.1} parent=1 // pred_check_branch
      %37 = sbr.rel (0) target = $region17
    $region16: #{tpu_custom_call.1} parent=1 // pred_region
      %39 = dma.done [#allocation6], 128
    $region17: #{tpu_custom_call.1} parent=1 // pred_fallthru
      _
    %v40 = vld [vmem:[#allocation2] sm:$0xff]
    %v41 = vmul.f32 %v40, 0.5
    %v42 = vld [vmem:[#allocation5] sm:$0xff]
    %v43 = vlaneseq
    %v44 = vshrl.u32 %v43, 7
    %v45 = vadd.s32 %v44, 8
    %v46 = vshll.u32 1, %v44
    %v47 = vshll.u32 1, %v45
    %v48 = vperm.slane %v42, 0
    %v49 = vand.u32 %v48, %v46
    %v50 = vand.u32 %v48, %v47
    %vm51 = vcmp.ne.s32.totalorder %v49, 0
    %vm52 = vcmp.ne.s32.totalorder %v50, 0
    %v53 = vperm.slane %v41, 0
    %v54 = vsel %vm51, %v53, inf
    %v55 = vsel %vm52, %v53, inf
    %v56 = vperm.slane %v42, 1
    %v57 = vand.u32 %v56, %v46
    %v58 = vand.u32 %v56, %v47
    %vm59 = vcmp.ne.s32.totalorder %v57, 0
    %vm60 = vcmp.ne.s32.totalorder %v58, 0
    %v61 = vperm.slane %v41, 1
    %v62 = vsel %vm59, %v61, inf
    %v63 = vsel %vm60, %v61, inf
    %v64 = vmin.f32 %v54, %v62
    %v65 = vmin.f32 %v55, %v63
    %v66 = vperm.slane %v42, 2
    %v67 = vand.u32 %v66, %v46
    %v68 = vand.u32 %v66, %v47
    %vm69 = vcmp.ne.s32.totalorder %v67, 0
    %vm70 = vcmp.ne.s32.totalorder %v68, 0
    %v71 = vperm.slane %v41, 2
    %v72 = vsel %vm69, %v71, inf
    %v73 = vsel %vm70, %v71, inf
    %v74 = vmin.f32 %v64, %v72
    %v75 = vmin.f32 %v65, %v73
    %v76 = vperm.slane %v42, 3
    %v77 = vand.u32 %v76, %v46
    %v78 = vand.u32 %v76, %v47
    %vm79 = vcmp.ne.s32.totalorder %v77, 0
    %vm80 = vcmp.ne.s32.totalorder %v78, 0
    %v81 = vperm.slane %v41, 3
    %v82 = vsel %vm79, %v81, inf
    %v83 = vsel %vm80, %v81, inf
    %v84 = vmin.f32 %v74, %v82
    %v85 = vmin.f32 %v75, %v83
    %v86 = vperm.slane %v42, 4
    %v87 = vand.u32 %v86, %v46
    %v88 = vand.u32 %v86, %v47
    %vm89 = vcmp.ne.s32.totalorder %v87, 0
    %vm90 = vcmp.ne.s32.totalorder %v88, 0
    %v91 = vperm.slane %v41, 4
    %v92 = vsel %vm89, %v91, inf
    %v93 = vsel %vm90, %v91, inf
    %v94 = vmin.f32 %v84, %v92
    %v95 = vmin.f32 %v85, %v93
    %v96 = vperm.slane %v42, 5
    %v97 = vand.u32 %v96, %v46
    %v98 = vand.u32 %v96, %v47
    %vm99 = vcmp.ne.s32.totalorder %v97, 0
    %vm100 = vcmp.ne.s32.totalorder %v98, 0
    %v101 = vperm.slane %v41, 5
    %v102 = vsel %vm99, %v101, inf
    %v103 = vsel %vm100, %v101, inf
    %v104 = vmin.f32 %v94, %v102
    %v105 = vmin.f32 %v95, %v103
    %v106 = vperm.slane %v42, 6
    %v107 = vand.u32 %v106, %v46
    %v108 = vand.u32 %v106, %v47
    %vm109 = vcmp.ne.s32.totalorder %v107, 0
    %vm110 = vcmp.ne.s32.totalorder %v108, 0
    %v111 = vperm.slane %v41, 6
    %v112 = vsel %vm109, %v111, inf
    %v113 = vsel %vm110, %v111, inf
    %v114 = vmin.f32 %v104, %v112
    %v115 = vmin.f32 %v105, %v113
    %v116 = vperm.slane %v42, 7
    %v117 = vand.u32 %v116, %v46
    %v118 = vand.u32 %v116, %v47
    %vm119 = vcmp.ne.s32.totalorder %v117, 0
    %vm120 = vcmp.ne.s32.totalorder %v118, 0
    %v121 = vperm.slane %v41, 7
    %v122 = vsel %vm119, %v121, inf
    %v123 = vsel %vm120, %v121, inf
    %v124 = vmin.f32 %v114, %v122
    %v125 = vmin.f32 %v115, %v123
    %v126 = vsub.f32 %v124, %v125
    %v127 = vmax.f32 %v126, -20.0
    %v128 = vmin.f32 %v127, 20.0
    %129 = vst [vmem:[#allocation7] sm:$0xff] %v128
    %v131 = vrot.slane %v124, 4
    %v133 = vsub.f32 %v124, %v131
    %v134 = vmax.f32 %v133, -20.0
    %v135 = vmin.f32 %v134, 20.0
    %136 = vst [vmem:[#allocation7 + $0x8] sm:$0xf] %v135
    %v138 = vrot.slane %v125, 4
    %v140 = vsub.f32 %v125, %v138
    %v141 = vmax.f32 %v140, -20.0
    %v142 = vmin.f32 %v141, 20.0
    %143 = vst [vmem:[#allocation7 + $0xc] sm:$0xf] %v142
    %v144 = vrot.slane %v124, 2
    %v146 = vsub.f32 %v124, %v144
    %v147 = vmax.f32 %v146, -20.0
    %v148 = vmin.f32 %v147, 20.0
    %149 = vst [vmem:[#allocation7 + $0x10] sm:$0x3] %v148
    %150 = vst [vmem:[#allocation7 + $0xe] sm:$0x30] %v148
    %v151 = vrot.slane %v125, 2
    %v153 = vsub.f32 %v125, %v151
    %v154 = vmax.f32 %v153, -20.0
    %v155 = vmin.f32 %v154, 20.0
    %156 = vst [vmem:[#allocation7 + $0x14] sm:$0x3] %v155
    %157 = vst [vmem:[#allocation7 + $0x12] sm:$0x30] %v155
    %v158 = vrot.slane %v124, 1
    %v160 = vsub.f32 %v124, %v158
    %v161 = vmax.f32 %v160, -20.0
    %v162 = vmin.f32 %v161, 20.0
    %163 = vst [vmem:[#allocation7 + $0x18] sm:$0x1] %v162
    %164 = vst [vmem:[#allocation7 + $0x17] sm:$0x4] %v162
    %165 = vst [vmem:[#allocation7 + $0x16] sm:$0x10] %v162
    %166 = vst [vmem:[#allocation7 + $0x15] sm:$0x40] %v162
    %v167 = vrot.slane %v125, 1
    %v169 = vsub.f32 %v125, %v167
    %v170 = vmax.f32 %v169, -20.0
    %v171 = vmin.f32 %v170, 20.0
    %172 = vst [vmem:[#allocation7 + $0x1c] sm:$0x1] %v171
    %173 = vst [vmem:[#allocation7 + $0x1b] sm:$0x4] %v171
    %174 = vst [vmem:[#allocation7 + $0x1a] sm:$0x10] %v171
    %175 = vst [vmem:[#allocation7 + $0x19] sm:$0x40] %v171
    // Predicated region
    $region18: #{tpu_custom_call.1} parent=1 // pred_check
      _
    $region19: #{tpu_custom_call.1} parent=1 // pred_check_branch
      %177 = sbr.rel (0) target = $region21
    $region20: #{tpu_custom_call.1} parent=1 // pred_region
      %179 = vsyncadd [#allocation4], 0
      %s180 = sshll.u32 [#allocation7], 4
      %s181 = int_to_ptr.vmem [resolvable:$true] %s180
      %s182 = sshll.u32 %s2, 4
      %s183 = int_to_ptr.hbm [resolvable:$true] %s182
      %188 = dma.vmem_to_hbm [thread:$0]  %s181, 512, %s183, [#allocation4], 128, 128, 8
    $region21: #{tpu_custom_call.1} parent=1 // pred_fallthru
      _
    // Predicated region
    $region22: #{tpu_custom_call.1} parent=1 // pred_check
      _
    $region23: #{tpu_custom_call.1} parent=1 // pred_check_branch
      %190 = sbr.rel (0) target = $region25
    $region24: #{tpu_custom_call.1} parent=1 // pred_region
      %192 = dma.done [#allocation4], 512
    $region25: #{tpu_custom_call.1} parent=1 // pred_fallthru
      _
    %193 = vsyncpa [#allocation3], 1
    %194 = vsyncpa [#allocation6], 1
    %195 = vsyncpa [#allocation4], 1

</llo_original>
